<compile_context>
chip_gen: v6e
topology: v6e:2x2x1
jax: 0.10.0
libtpu: 0.0.40
codegen_flags: <defaults>
</compile_context>

<pallas_src>
import functools

import jax
import jax.numpy as jnp
from jax import lax
from jax.experimental import pallas as pl
from jax.experimental.pallas import tpu as pltpu

N_EMBD = 384      # n_embd in the PyTorch module
BLOCK_SIZE = 128  # block_size in the PyTorch module (max seq len for the causal mask)


def _pick_batch_block(B: int) -> int:
    """Largest batch block <= 8 that divides B while keeping >= 2 grid steps (v7x dual-TC)."""
    for bb in (8, 4, 2):
        if B % bb == 0 and B // bb >= 2:
            return bb
    return 1


def fuse_head_weights(w_key, w_query, w_value):
    """Fuse PyTorch-layout (H, C) q/k/v weights into one bf16 (3H, C) matrix.

    The module's C**-0.5 softmax scale is folded into the query weights. Call once
    (outside the per-step path); the result is a jit-time constant when the weights are.
    """
    H, C = w_key.shape
    scale = float(C) ** (-0.5)
    w = jnp.concatenate([w_query * scale, w_key, w_value], axis=0)   # (3H, C)
    return w.astype(jnp.bfloat16)


def _head_kernel(x_ref, w_ref, o_ref, *, head_size):
    H = head_size
    Bb, T, C = x_ref.shape

    x = x_ref[...]                       # (Bb, T, C)  bf16
    w = w_ref[...]                       # (3H, C)     bf16

    # Fused q/k/v projection: contract C directly against the PyTorch-layout (3H, C)
    # weight (no transpose materialized), accumulate in f32 on the MXU.
    qkv = lax.dot_general(
        x.reshape(Bb * T, C), w,
        dimension_numbers=(((1,), (1,)), ((), ())),
        preferred_element_type=jnp.float32,
    ).reshape(Bb, T, 3 * H)

    q = qkv[..., 0 * H:1 * H].astype(jnp.bfloat16)   # already scaled by C**-0.5 (in weights)
    k = qkv[..., 1 * H:2 * H].astype(jnp.bfloat16)
    v = qkv[..., 2 * H:3 * H].astype(jnp.bfloat16)

    # Scores: contract the head dim of q and k directly (no k.T), f32 accumulation.
    s = jnp.einsum("bqh,bkh->bqk", q, k,
                   preferred_element_type=jnp.float32)               # (Bb, T, T)

    # Causal mask (keep col <= row). Every row keeps >= 1 entry, so -inf is safe.
    row = lax.broadcasted_iota(jnp.int32, (T, T), 0)
    col = lax.broadcasted_iota(jnp.int32, (T, T), 1)
    s = jnp.where((col <= row)[None, :, :], s, -jnp.inf)

    # Numerically-stable softmax in f32 (bf16 elementwise would be emulated on v5e).
    m = jnp.max(s, axis=-1, keepdims=True)
    e = jnp.exp(s - m)
    denom = jnp.sum(e, axis=-1, keepdims=True)
    p = e * pl.reciprocal(denom, approx=True)        # EUP vrcp; safe for a softmax denom

    # Dropout: identity in inference (eval) mode.

    out = jnp.einsum("bqk,bkh->bqh", p.astype(jnp.bfloat16), v,
                     preferred_element_type=jnp.float32)              # (Bb, T, H)
    o_ref[...] = out.astype(o_ref.dtype)


def head_forward(x, w_qkv, *, head_size):
    """x: (B, T, C). w_qkv: fused bf16 (3*head_size, C) from fuse_head_weights.

    Returns (B, T, head_size) in x.dtype.
    """
    B, T, C = x.shape
    H = head_size
    assert C == N_EMBD and T <= BLOCK_SIZE
    assert w_qkv.shape == (3 * H, C)

    Bb = _pick_batch_block(B)
    grid = (B // Bb,)

    # bf16 activations at the boundary: halves the per-step HBM->VMEM DMA, and the
    # MXU operands are bf16 anyway.
    x_bf16 = x.astype(jnp.bfloat16)

    flops = 2 * B * T * C * 3 * H + 2 * (2 * B * T * T * H)
    bytes_accessed = (B * T * C * 2) + (3 * H * C * 2) + (B * T * H * x.dtype.itemsize)
    cost = pl.CostEstimate(flops=flops, transcendentals=B * T * T,
                           bytes_accessed=bytes_accessed)

    kernel = functools.partial(_head_kernel, head_size=H)

    return pl.pallas_call(
        kernel,
        out_shape=jax.ShapeDtypeStruct((B, T, H), x.dtype),
        grid_spec=pltpu.PrefetchScalarGridSpec(
            num_scalar_prefetch=0,
            grid=grid,
            in_specs=[
                pl.BlockSpec((Bb, T, C), lambda b: (b, 0, 0)),
                pl.BlockSpec((3 * H, C), lambda b: (0, 0)),
            ],
            out_specs=pl.BlockSpec((Bb, T, H), lambda b: (b, 0, 0)),
        ),
        compiler_params=pltpu.CompilerParams(
            dimension_semantics=("parallel",),
        ),
        cost_estimate=cost,
    )(x_bf16, w_qkv)


def head_forward_ref(x, w_key, w_query, w_value):
    """Pure-JAX f32 reference matching the PyTorch forward (eval mode)."""
    B, T, C = x.shape
    k = x @ w_key.T
    q = x @ w_query.T
    v = x @ w_value.T
    wei = (q @ jnp.swapaxes(k, -2, -1)) * (float(C) ** (-0.5))
    row = jnp.arange(T)[:, None]
    col = jnp.arange(T)[None, :]
    wei = jnp.where(col <= row, wei, -jnp.inf)
    wei = jax.nn.softmax(wei, axis=-1)
    return wei @ v


if __name__ == "__main__":
    B = 2
    T = 128          # seq length (= block_size; keeps lane/sublane alignment)
    C = N_EMBD       # 384
    HEAD_SIZE = 64

    key = jax.random.PRNGKey(0)
    kx, kq, kk, kv = jax.random.split(key, 4)

    x = jax.random.normal(kx, (B, T, C), dtype=jnp.float32)
    # Deterministic "nn.Linear(n_embd, head_size, bias=False)" weights, PyTorch layout (H, C).
    w_key = jax.random.normal(kk, (HEAD_SIZE, C), dtype=jnp.float32) * (C ** -0.5)
    w_query = jax.random.normal(kq, (HEAD_SIZE, C), dtype=jnp.float32) * (C ** -0.5)
    w_value = jax.random.normal(kv, (HEAD_SIZE, C), dtype=jnp.float32) * (C ** -0.5)

    # One-time weight fusion (outside the per-call path; jit-constant in a real model).
    w_qkv = fuse_head_weights(w_key, w_query, w_value)

    out = head_forward(x, w_qkv, head_size=HEAD_SIZE)
    out = jax.block_until_ready(out)

    ref = head_forward_ref(x, w_key, w_query, w_value)
    assert out.shape == (B, T, HEAD_SIZE)
    # bf16 matmul operands + approx reciprocal => looser tolerance than the f32 reference.
    max_err = float(jnp.max(jnp.abs(out - ref)))
    assert jnp.allclose(out, ref, atol=3e-2, rtol=3e-2), f"mismatch vs reference (max abs err {max_err})"

    print("KERNEL_OK")
</pallas_src>

<mosaic_0001>
module attributes {stable_mosaic.version = 11 : i64} {
  func.func @_head_kernel(%arg0: i32, %arg1: memref<1x128x384xbf16, #tpu.memory_space<vmem>>, %arg2: memref<192x384xbf16, #tpu.memory_space<vmem>>, %arg3: memref<1x128x64xf32, #tpu.memory_space<vmem>>) attributes {dimension_semantics = [#tpu.dimension_semantics<parallel>], iteration_bounds = array<i64: 2>, scalar_prefetch = 0 : i64, scratch_operands = 0 : i64, tpu.core_type = #tpu.core_type<tc>, window_params = [{transform_indices = @transform_0, window_bounds = array<i64: 1, 128, 384>}, {pipeline_mode = #tpu.pipeline_mode<synchronous>, transform_indices = @transform_1, window_bounds = array<i64: 192, 384>}, {transform_indices = @transform_2, window_bounds = array<i64: 1, 128, 64>}]} {
    %c0 = arith.constant 0 : index
    %c0_0 = arith.constant 0 : index
    %c0_1 = arith.constant 0 : index
    %0 = vector.load %arg1[%c0, %c0_0, %c0_1] : memref<1x128x384xbf16, #tpu.memory_space<vmem>>, vector<1x128x384xbf16>
    %c0_2 = arith.constant 0 : index
    %c0_3 = arith.constant 0 : index
    %1 = vector.load %arg2[%c0_2, %c0_3] : memref<192x384xbf16, #tpu.memory_space<vmem>>, vector<192x384xbf16>
    %2 = vector.shape_cast %0 : vector<1x128x384xbf16> to vector<128x384xbf16>
    %cst = arith.constant dense<0.000000e+00> : vector<128x192xf32>
    %3 = tpu.matmul %2, %1, %cst {dimension_numbers = #tpu.dot_dimension_numbers<[1], [1], [0], [0], [0, 0, 1, 0], [], []>} : vector<128x384xbf16>, vector<192x384xbf16>, vector<128x192xf32> -> vector<128x192xf32>
    %4 = vector.shape_cast %3 : vector<128x192xf32> to vector<1x128x192xf32>
    %5 = vector.extract_strided_slice %4 {offsets = [0, 0, 0], sizes = [1, 128, 64], strides = [1, 1, 1]} : vector<1x128x192xf32> to vector<1x128x64xf32>
    %6 = arith.truncf %5 : vector<1x128x64xf32> to vector<1x128x64xbf16>
    %7 = vector.extract_strided_slice %4 {offsets = [0, 0, 64], sizes = [1, 128, 64], strides = [1, 1, 1]} : vector<1x128x192xf32> to vector<1x128x64xf32>
    %8 = arith.truncf %7 : vector<1x128x64xf32> to vector<1x128x64xbf16>
    %9 = vector.extract_strided_slice %4 {offsets = [0, 0, 128], sizes = [1, 128, 64], strides = [1, 1, 1]} : vector<1x128x192xf32> to vector<1x128x64xf32>
    %10 = arith.truncf %9 : vector<1x128x64xf32> to vector<1x128x64xbf16>
    "tpu.trace_start"() <{level = 10 : i32, message = "bqh,bkh->bqk"}> : () -> ()
    %cst_4 = arith.constant dense<0.000000e+00> : vector<1x128x128xf32>
    %11 = tpu.matmul %6, %8, %cst_4 {dimension_numbers = #tpu.dot_dimension_numbers<[2], [2], [1], [1], [0, 0, 0, 1, 1, 1], [0], [0]>} : vector<1x128x64xbf16>, vector<1x128x64xbf16>, vector<1x128x128xf32> -> vector<1x128x128xf32>
    "tpu.trace_stop"() : () -> ()
    %12 = tpu.iota {dimensions = array<i32: 0>} : vector<128x128xi32>
    %13 = tpu.iota {dimensions = array<i32: 1>} : vector<128x128xi32>
    %14 = arith.cmpi sle, %13, %12 : vector<128x128xi32>
    %15 = vector.shape_cast %14 : vector<128x128xi1> to vector<1x128x128xi1>
    %cst_5 = arith.constant 0xFF800000 : f32
    %16 = vector.broadcast %cst_5 : f32 to vector<1x128x128xf32>
    %17 = arith.select %15, %11, %16 : vector<1x128x128xi1>, vector<1x128x128xf32>
    %cst_6 = arith.constant dense<0xFF800000> : vector<1x128xf32>
    %18 = vector.multi_reduction <maximumf>, %17, %cst_6 [2] : vector<1x128x128xf32> to vector<1x128xf32>
    %19 = vector.shape_cast %18 : vector<1x128xf32> to vector<1x128x1xf32>
    %20 = vector.broadcast %19 : vector<1x128x1xf32> to vector<1x128x128xf32>
    %21 = arith.subf %17, %20 : vector<1x128x128xf32>
    %22 = math.exp %21 : vector<1x128x128xf32>
    %cst_7 = arith.constant dense<0.000000e+00> : vector<1x128xf32>
    %23 = vector.multi_reduction <add>, %22, %cst_7 [2] : vector<1x128x128xf32> to vector<1x128xf32>
    %24 = vector.shape_cast %23 : vector<1x128xf32> to vector<1x128x1xf32>
    %25 = tpu.reciprocal %24 {approx = true} : vector<1x128x1xf32> -> vector<1x128x1xf32>
    %26 = vector.broadcast %25 : vector<1x128x1xf32> to vector<1x128x128xf32>
    %27 = arith.mulf %22, %26 : vector<1x128x128xf32>
    %28 = arith.truncf %27 : vector<1x128x128xf32> to vector<1x128x128xbf16>
    "tpu.trace_start"() <{level = 10 : i32, message = "bqk,bkh->bqh"}> : () -> ()
    %cst_8 = arith.constant dense<0.000000e+00> : vector<1x128x64xf32>
    %29 = tpu.matmul %28, %10, %cst_8 {dimension_numbers = #tpu.dot_dimension_numbers<[2], [1], [1], [2], [0, 0, 0, 1, 1, 2], [0], [0]>} : vector<1x128x128xbf16>, vector<1x128x64xbf16>, vector<1x128x64xf32> -> vector<1x128x64xf32>
    "tpu.trace_stop"() : () -> ()
    %c0_9 = arith.constant 0 : index
    %c0_10 = arith.constant 0 : index
    %c0_11 = arith.constant 0 : index
    %30 = vector.load %arg3[%c0_9, %c0_10, %c0_11] : memref<1x128x64xf32, #tpu.memory_space<vmem>>, vector<1x128x64xf32>
    tpu.vector_store %arg3[%c0_9, %c0_10, %c0_11], %29 {strides = array<i32>} : memref<1x128x64xf32, #tpu.memory_space<vmem>>, vector<1x128x64xf32>,
    return
  }
  func.func @transform_0(%arg0: i32) -> (i32, i32, i32) {
    %c0_i32 = arith.constant 0 : i32
    %c0_i32_0 = arith.constant 0 : i32
    %c0_i32_1 = arith.constant 0 : i32
    return %arg0, %c0_i32, %c0_i32_0 : i32, i32, i32
  }
  func.func @transform_1(%arg0: i32) -> (i32, i32) {
    %c0_i32 = arith.constant 0 : i32
    %c0_i32_0 = arith.constant 0 : i32
    %c0_i32_1 = arith.constant 0 : i32
    return %c0_i32, %c0_i32_0 : i32, i32
  }
  func.func @transform_2(%arg0: i32) -> (i32, i32, i32) {
    %c0_i32 = arith.constant 0 : i32
    %c0_i32_0 = arith.constant 0 : i32
    %c0_i32_1 = arith.constant 0 : i32
    return %arg0, %c0_i32, %c0_i32_0 : i32, i32, i32
  }
}

</mosaic_0001>

<llo_original>
// kernel: tpu_custom_call.1
$region0: #{tpu_custom_call.1}
  #allocation0 [shape = 'u32[]', space=smem, size = 0x4, offset = 0x4, fixed_abs, tag = 'smem constant byte address 0x4 - core index']
  #allocation1 [shape = 'u32[144,128]{1,0:T(1,128)}', space=vmem, size = 0x12000, scoped, tag = 'internal scratch']
  %s0 = inlined_call_operand.hbm [shape: bf16[2,128,384], index: 0, kind: input, shape index: {}]
  %s1 = inlined_call_operand.hbm [shape: bf16[192,384], index: 1, kind: input, shape index: {}]
  %s2 = inlined_call_operand.vmem [shape: f32[2,128,64], index: 2, kind: output, shape index: {}]
  %s3 = sld [smem:[#allocation0]]
  $region49: #{tpu_custom_call.1} parent=0
    _
  %s5 = ssub.s32 1, %s3
  %s6 = scalar_select 0, %s5, %s3
  $region1: #{tpu_custom_call.1} parent=0
    #allocation2 [shape = 'u8[196608]{0}', space=vmem, size = 0x30000, scoped, tag = 'input window, operand 0']
    #allocation3 [shape = 's32[2]{0}', space=sflag, size = 0x8, scoped, tag = 'scoped memory for tpu_custom_call.1']
    #allocation4 [shape = 'u8[147456]{0}', space=vmem, size = 0x24000, scoped, tag = 'input window, operand 1, single buffered']
    #allocation5 [shape = 's32[1]{0}', space=sflag, size = 0x4, scoped, tag = 'scoped memory for tpu_custom_call.1']
    %7 = vsyncpa [#allocation3], 0
    %s8 = scalar_lea.sflag [#allocation3], 1
    %9 = vsyncpa %s8, 0
    %10 = vsyncpa [#allocation5], 0
    loop: start=0, step=1, limit=4
    $region2: #{tpu_custom_call.1} parent=1 // loop_pre_header
      _
    $region3: #{tpu_custom_call.1} parent=1 // loop_header
      %s12 = sphi 0, %s16
      %p13 = scmp.ge.s32.totalorder %s12, 4
      %s22 = sphi 0, %s24
      %s25 = sphi 0, %s22
      %s26 = sphi 0, %s25
      %s42 = sphi 0, %s26
      %s46 = sphi 0, %s46
      %s48 = sphi 0, %s46
      %s49 = sphi 0, %s48
      %s63 = sphi 0, %s49
      %s69 = sphi 0, %s71
      %s72 = sphi 0, %s69
      %s73 = sphi 0, %s72
      %s89 = sphi 0, %s73
    $region4: #{tpu_custom_call.1} parent=1 // loop_header_branch
      %15 = sbr.rel (%p13) target = $region8
    $region5: #{tpu_custom_call.1} parent=1 // loop_body
      %s17 = ssub.s32 %s12, 1
      %s18 = ssub.s32 %s12, 2
      %s19 = sadd.s32 %s12, 1
      %s20 = ssub.s32 %s12, %s19
      %p21 = scmp.eq.s32.totalorder %s20, 0
      %s23 = sadd.s32 %s22, 1
      %s24 = scalar_select %p21, %s22, %s23
      %p27 = pneg %p21
      %p28 = scmp.eq.s32.totalorder %s12, 1
      %p29 = por %p27, %p28
      %p30 = scmp.ne.s32.totalorder %s22, %s25
      %p31 = scmp.eq.s32.totalorder %s12, 0
      %p32 = por %p30, %p31
      %p33 = scmp.ne.s32.totalorder %s22, %s25
      %p34 = scmp.eq.s32.totalorder %s17, 1
      %p35 = por %p33, %p34
      %p36 = scmp.ne.s32.totalorder %s25, %s26
      %p37 = scmp.eq.s32.totalorder %s17, 0
      %p38 = por %p36, %p37
      %p39 = scmp.ne.s32.totalorder %s25, %s26
      %p40 = scmp.eq.s32.totalorder %s18, 1
      %p41 = por %p39, %p40
      %p43 = scmp.ne.s32.totalorder %s26, %s42
      %p44 = scmp.eq.s32.totalorder %s18, 0
      %p45 = por %p43, %p44
      %s47 = sadd.s32 %s46, 1
      %p50 = scmp.eq.s32.totalorder %s12, 1
      %p51 = scmp.ne.s32.totalorder %s46, %s48
      %p52 = scmp.eq.s32.totalorder %s12, 0
      %p53 = por %p51, %p52
      %p54 = scmp.ne.s32.totalorder %s46, %s48
      %p55 = scmp.eq.s32.totalorder %s17, 1
      %p56 = por %p54, %p55
      %p57 = scmp.ne.s32.totalorder %s48, %s49
      %p58 = scmp.eq.s32.totalorder %s17, 0
      %p59 = por %p57, %p58
      %p60 = scmp.ne.s32.totalorder %s48, %s49
      %p61 = scmp.eq.s32.totalorder %s18, 1
      %p62 = por %p60, %p61
      %p64 = scmp.ne.s32.totalorder %s49, %s63
      %p65 = scmp.eq.s32.totalorder %s18, 0
      %p66 = por %p64, %p65
      %s67 = ssub.s32 %s12, %s19
      %p68 = scmp.eq.s32.totalorder %s67, 0
      %s70 = sadd.s32 %s69, 1
      %s71 = scalar_select %p68, %s69, %s70
      %p74 = pneg %p68
      %p75 = scmp.eq.s32.totalorder %s12, 1
      %p76 = por %p74, %p75
      %p77 = scmp.ne.s32.totalorder %s69, %s72
      %p78 = scmp.eq.s32.totalorder %s12, 0
      %p79 = por %p77, %p78
      %p80 = scmp.ne.s32.totalorder %s69, %s72
      %p81 = scmp.eq.s32.totalorder %s17, 1
      %p82 = por %p80, %p81
      %p83 = scmp.ne.s32.totalorder %s72, %s73
      %p84 = scmp.eq.s32.totalorder %s17, 0
      %p85 = por %p83, %p84
      %p86 = scmp.ne.s32.totalorder %s72, %s73
      %p87 = scmp.eq.s32.totalorder %s18, 1
      %p88 = por %p86, %p87
      %p90 = scmp.ne.s32.totalorder %s73, %s89
      %p91 = scmp.eq.s32.totalorder %s18, 0
      %p92 = por %p90, %p91
      %p93 = scmp.le.s32.totalorder 1, %s12
      %p94 = scmp.lt.s32.totalorder %s12, 3
      %p95 = pnand %p93, %p94
      %p96 = pneg %p95
      // Predicated region
      $region9: #{tpu_custom_call.1} parent=5 // pred_check
        _
      $region10: #{tpu_custom_call.1} parent=5 // pred_check_branch
        %98 = sbr.rel (%p95) target = $region12
      $region11: #{tpu_custom_call.1} parent=5 // pred_region
        %s99 = ssub.s32 %s12, 1
        // Predicated region
        $region13: #{tpu_custom_call.1} parent=11 // pred_check
          %p100 = pneg %p59
        $region14: #{tpu_custom_call.1} parent=11 // pred_check_branch
          %102 = sbr.rel (%p100) target = $region16
        $region15: #{tpu_custom_call.1} parent=11 // pred_region
          %s104 = ssub.s32 4608, 4608
          %105 = vsyncadd [#allocation5], %s104
          %s106 = sshll.u32 [#allocation4], 4
          %s107 = int_to_ptr.vmem [resolvable:$true] %s106
          %112 = dma.hbm_to_vmem [thread:$0]  %s1, 4608, %s107, [#allocation5], 192, 192, 12
        $region16: #{tpu_custom_call.1} parent=11 // pred_fallthru
          _
      $region12: #{tpu_custom_call.1} parent=5 // pred_fallthru
        _
      %p113 = scmp.lt.s32.totalorder %s12, 2
      // Predicated region
      $region17: #{tpu_custom_call.1} parent=5 // pred_check
        %p114 = pneg %p113
      $region18: #{tpu_custom_call.1} parent=5 // pred_check_branch
        %116 = sbr.rel (%p114) target = $region20
      $region19: #{tpu_custom_call.1} parent=5 // pred_region
        // Predicated region
        $region21: #{tpu_custom_call.1} parent=19 // pred_check
          %p117 = pneg %p32
        $region22: #{tpu_custom_call.1} parent=19 // pred_check_branch
          %119 = sbr.rel (%p117) target = $region24
        $region23: #{tpu_custom_call.1} parent=19 // pred_region
          %s120 = sand.u32 %s22, 1
          %s121 = scalar_lea.sflag [#allocation3], %s120
          %s122 = sand.u32 %s22, 1
          %s123 = smul.addr %s122, 192
          %s124 = scalar_lea.vmem [#allocation2], %s123
          %s126 = ssub.s32 3072, 3072
          %127 = vsyncadd %s121, %s126
          %s128 = smul.addr %s12, 48
          %s129 = smul.addr %s128, 64
          %s130 = scalar_lea.hbm %s0, %s129
          %s131 = sshll.u32 %s124, 4
          %s132 = int_to_ptr.vmem [resolvable:$true] %s131
          %137 = dma.hbm_to_vmem [thread:$0]  %s130, 3072, %s132, %s121, 192, 192, 12
        $region24: #{tpu_custom_call.1} parent=19 // pred_fallthru
          _
      $region20: #{tpu_custom_call.1} parent=5 // pred_fallthru
        _
      %p138 = scmp.le.s32.totalorder 1, %s12
      %p139 = scmp.lt.s32.totalorder %s12, 3
      %p140 = pnand %p138, %p139
      %p141 = pneg %p140
      // Predicated region
      $region25: #{tpu_custom_call.1} parent=5 // pred_check
        _
      $region26: #{tpu_custom_call.1} parent=5 // pred_check_branch
        %143 = sbr.rel (%p140) target = $region28
      $region27: #{tpu_custom_call.1} parent=5 // pred_region
        %s144 = ssub.s32 %s12, 1
        %s145 = sand.u32 %s25, 1
        %s146 = scalar_lea.sflag [#allocation3], %s145
        %s147 = sand.u32 %s25, 1
        %s148 = smul.addr %s147, 192
        %s149 = scalar_lea.vmem [#allocation2], %s148
        // Predicated region
        $region29: #{tpu_custom_call.1} parent=27 // pred_check
          %p150 = pneg %p38
        $region30: #{tpu_custom_call.1} parent=27 // pred_check_branch
          %152 = sbr.rel (%p150) target = $region32
        $region31: #{tpu_custom_call.1} parent=27 // pred_region
          %153 = dma.done %s146, 3072
        $region32: #{tpu_custom_call.1} parent=27 // pred_fallthru
          _
        // Predicated region
        $region33: #{tpu_custom_call.1} parent=27 // pred_check
          %p154 = pneg %p59
        $region34: #{tpu_custom_call.1} parent=27 // pred_check_branch
          %156 = sbr.rel (%p154) target = $region36
        $region35: #{tpu_custom_call.1} parent=27 // pred_region
          %157 = dma.done [#allocation5], 4608
        $region36: #{tpu_custom_call.1} parent=27 // pred_fallthru
          _
        %s158 = sand.u32 %s25, 1
        %s159 = scalar_lea.sflag [#allocation3], %s158
        %s160 = sand.u32 %s25, 1
        %s161 = smul.addr %s160, 192
        %s162 = scalar_lea.vmem [#allocation2], %s161
        %p163 = pneg %p38
        %p164 = pneg %p35
        %p165 = pneg %p59
        %p166 = pneg %p56
        %p167 = pneg %p85
        %p168 = pneg %p82
        %p169 = scmp.lt.s32.totalorder %s17, 1
        %s170 = scalar_select %p169, %s17, 1
        %s171 = smul.addr %s170, 16
        %s172 = smul.addr %s171, 8
        %s173 = scalar_lea.vmem %s2, %s172
        %p174 = scmp.lt.s32.totalorder %s17, 1
        %s175 = scalar_select %p174, %s17, 1
        %s176 = smul.addr %s175, 16
        %s177 = smul.addr %s176, 8
        %s178 = scalar_lea.vmem %s2, %s177
        %v180 = vld [vmem:[%s149] sm:$0xff]
        %v181 = vld [vmem:[%s149 + $0x8] sm:$0xf]
        %v182 = vld [vmem:[%s149 + $0xc] sm:$0xff]
        %v183 = vld [vmem:[%s149 + $0x14] sm:$0xf]
        %v184 = vld [vmem:[%s149 + $0x18] sm:$0xff]
        %v185 = vld [vmem:[%s149 + $0x20] sm:$0xf]
        %v186 = vld [vmem:[%s149 + $0x24] sm:$0xff]
        %v187 = vld [vmem:[%s149 + $0x2c] sm:$0xf]
        %v188 = vld [vmem:[%s149 + $0x30] sm:$0xff]
        %v189 = vld [vmem:[%s149 + $0x38] sm:$0xf]
        %v190 = vld [vmem:[%s149 + $0x3c] sm:$0xff]
        %v191 = vld [vmem:[%s149 + $0x44] sm:$0xf]
        %v192 = vld [vmem:[%s149 + $0x48] sm:$0xff]
        %v193 = vld [vmem:[%s149 + $0x50] sm:$0xf]
        %v194 = vld [vmem:[%s149 + $0x54] sm:$0xff]
        %v195 = vld [vmem:[%s149 + $0x5c] sm:$0xf]
        %v196 = vld [vmem:[%s149 + $0x60] sm:$0xff]
        %v197 = vld [vmem:[%s149 + $0x68] sm:$0xf]
        %v198 = vld [vmem:[%s149 + $0x6c] sm:$0xff]
        %v199 = vld [vmem:[%s149 + $0x74] sm:$0xf]
        %v200 = vld [vmem:[%s149 + $0x78] sm:$0xff]
        %v201 = vld [vmem:[%s149 + $0x80] sm:$0xf]
        %v202 = vld [vmem:[%s149 + $0x84] sm:$0xff]
        %v203 = vld [vmem:[%s149 + $0x8c] sm:$0xf]
        %v204 = vld [vmem:[%s149 + $0x90] sm:$0xff]
        %v205 = vld [vmem:[%s149 + $0x98] sm:$0xf]
        %v206 = vld [vmem:[%s149 + $0x9c] sm:$0xff]
        %v207 = vld [vmem:[%s149 + $0xa4] sm:$0xf]
        %v208 = vld [vmem:[%s149 + $0xa8] sm:$0xff]
        %v209 = vld [vmem:[%s149 + $0xb0] sm:$0xf]
        %v210 = vld [vmem:[%s149 + $0xb4] sm:$0xff]
        %v211 = vld [vmem:[%s149 + $0xbc] sm:$0xf]
        %v212 = vld [vmem:[#allocation4] sm:$0xff]
        %v213 = vld [vmem:[#allocation4 + $0x8] sm:$0xf]
        %v214 = vld [vmem:[#allocation4 + $0xc] sm:$0xff]
        %v215 = vld [vmem:[#allocation4 + $0x14] sm:$0xf]
        %v216 = vld [vmem:[#allocation4 + $0x18] sm:$0xff]
        %v217 = vld [vmem:[#allocation4 + $0x20] sm:$0xf]
        %v218 = vld [vmem:[#allocation4 + $0x24] sm:$0xff]
        %v219 = vld [vmem:[#allocation4 + $0x2c] sm:$0xf]
        %v220 = vld [vmem:[#allocation4 + $0x30] sm:$0xff]
        %v221 = vld [vmem:[#allocation4 + $0x38] sm:$0xf]
        %v222 = vld [vmem:[#allocation4 + $0x3c] sm:$0xff]
        %v223 = vld [vmem:[#allocation4 + $0x44] sm:$0xf]
        %v224 = vld [vmem:[#allocation4 + $0x48] sm:$0xff]
        %v225 = vld [vmem:[#allocation4 + $0x50] sm:$0xf]
        %v226 = vld [vmem:[#allocation4 + $0x54] sm:$0xff]
        %v227 = vld [vmem:[#allocation4 + $0x5c] sm:$0xf]
        %v228 = vld [vmem:[#allocation4 + $0x60] sm:$0xff]
        %v229 = vld [vmem:[#allocation4 + $0x68] sm:$0xf]
        %v230 = vld [vmem:[#allocation4 + $0x6c] sm:$0xff]
        %v231 = vld [vmem:[#allocation4 + $0x74] sm:$0xf]
        %v232 = vld [vmem:[#allocation4 + $0x78] sm:$0xff]
        %v233 = vld [vmem:[#allocation4 + $0x80] sm:$0xf]
        %v234 = vld [vmem:[#allocation4 + $0x84] sm:$0xff]
        %v235 = vld [vmem:[#allocation4 + $0x8c] sm:$0xf]
        %v236 = vld [vmem:[#allocation4 + $0x90] sm:$0xff]
        %v237 = vld [vmem:[#allocation4 + $0x98] sm:$0xf]
        %v238 = vld [vmem:[#allocation4 + $0x9c] sm:$0xff]
        %v239 = vld [vmem:[#allocation4 + $0xa4] sm:$0xf]
        %v240 = vld [vmem:[#allocation4 + $0xa8] sm:$0xff]
        %v241 = vld [vmem:[#allocation4 + $0xb0] sm:$0xf]
        %v242 = vld [vmem:[#allocation4 + $0xb4] sm:$0xff]
        %v243 = vld [vmem:[#allocation4 + $0xbc] sm:$0xf]
        %v244 = vld [vmem:[#allocation4 + $0xc0] sm:$0xff]
        %v245 = vld [vmem:[#allocation4 + $0xc8] sm:$0xf]
        %v246 = vld [vmem:[#allocation4 + $0xcc] sm:$0xff]
        %v247 = vld [vmem:[#allocation4 + $0xd4] sm:$0xf]
        %v248 = vld [vmem:[#allocation4 + $0xd8] sm:$0xff]
        %v249 = vld [vmem:[#allocation4 + $0xe0] sm:$0xf]
        %v250 = vld [vmem:[#allocation4 + $0xe4] sm:$0xff]
        %v251 = vld [vmem:[#allocation4 + $0xec] sm:$0xf]
        %v252 = vld [vmem:[#allocation4 + $0xf0] sm:$0xff]
        %v253 = vld [vmem:[#allocation4 + $0xf8] sm:$0xf]
        %v254 = vld [vmem:[#allocation4 + $0xfc] sm:$0xff]
        %v255 = vld [vmem:[#allocation4 + $0x104] sm:$0xf]
        %v256 = vld [vmem:[#allocation4 + $0x108] sm:$0xff]
        %v257 = vld [vmem:[#allocation4 + $0x110] sm:$0xf]
        %v258 = vld [vmem:[#allocation4 + $0x114] sm:$0xff]
        %v259 = vld [vmem:[#allocation4 + $0x11c] sm:$0xf]
        %v292 = vunpack.c.l.b16 %v180
        %v293 = vunpack.c.h.b16 %v180
        %v294 = vunpack.c.l.b16 %v181
        %v295 = vunpack.c.l.b16 %v182
        %v296 = vunpack.c.h.b16 %v182
        %v297 = vunpack.c.l.b16 %v183
        %v298 = vunpack.c.l.b16 %v184
        %v299 = vunpack.c.h.b16 %v184
        %v300 = vunpack.c.l.b16 %v185
        %v301 = vunpack.c.l.b16 %v186
        %v302 = vunpack.c.h.b16 %v186
        %v303 = vunpack.c.l.b16 %v187
        %v304 = vunpack.c.l.b16 %v188
        %v305 = vunpack.c.h.b16 %v188
        %v306 = vunpack.c.l.b16 %v189
        %v307 = vunpack.c.l.b16 %v190
        %v308 = vunpack.c.h.b16 %v190
        %v309 = vunpack.c.l.b16 %v191
        %v310 = vunpack.c.l.b16 %v192
        %v311 = vunpack.c.h.b16 %v192
        %v312 = vunpack.c.l.b16 %v193
        %v313 = vunpack.c.l.b16 %v194
        %v314 = vunpack.c.h.b16 %v194
        %v315 = vunpack.c.l.b16 %v195
        %v316 = vunpack.c.l.b16 %v196
        %v317 = vunpack.c.h.b16 %v196
        %v318 = vunpack.c.l.b16 %v197
        %v319 = vunpack.c.l.b16 %v198
        %v320 = vunpack.c.h.b16 %v198
        %v321 = vunpack.c.l.b16 %v199
        %v322 = vunpack.c.l.b16 %v200
        %v323 = vunpack.c.h.b16 %v200
        %v324 = vunpack.c.l.b16 %v201
        %v325 = vunpack.c.l.b16 %v202
        %v326 = vunpack.c.h.b16 %v202
        %v327 = vunpack.c.l.b16 %v203
        %v328 = vunpack.c.l.b16 %v204
        %v329 = vunpack.c.h.b16 %v204
        %v330 = vunpack.c.l.b16 %v205
        %v331 = vunpack.c.l.b16 %v206
        %v332 = vunpack.c.h.b16 %v206
        %v333 = vunpack.c.l.b16 %v207
        %v334 = vunpack.c.l.b16 %v208
        %v335 = vunpack.c.h.b16 %v208
        %v336 = vunpack.c.l.b16 %v209
        %v337 = vunpack.c.l.b16 %v210
        %v338 = vunpack.c.h.b16 %v210
        %v339 = vunpack.c.l.b16 %v211
        %v340 = vpack.c.b16 %v295, %v292
        %v341 = vpack.c.b16 %v296, %v293
        %v342 = vpack.c.b16 %v297, %v294
        %v343 = vpack.c.b16 %v301, %v298
        %v344 = vpack.c.b16 %v302, %v299
        %v345 = vpack.c.b16 %v303, %v300
        %v346 = vpack.c.b16 %v307, %v304
        %v347 = vpack.c.b16 %v308, %v305
        %v348 = vpack.c.b16 %v309, %v306
        %v349 = vpack.c.b16 %v313, %v310
        %v350 = vpack.c.b16 %v314, %v311
        %v351 = vpack.c.b16 %v315, %v312
        %v352 = vpack.c.b16 %v319, %v316
        %v353 = vpack.c.b16 %v320, %v317
        %v354 = vpack.c.b16 %v321, %v318
        %v355 = vpack.c.b16 %v325, %v322
        %v356 = vpack.c.b16 %v326, %v323
        %v357 = vpack.c.b16 %v327, %v324
        %v358 = vpack.c.b16 %v331, %v328
        %v359 = vpack.c.b16 %v332, %v329
        %v360 = vpack.c.b16 %v333, %v330
        %v361 = vpack.c.b16 %v337, %v334
        %v362 = vpack.c.b16 %v338, %v335
        %v363 = vpack.c.b16 %v339, %v336
        %v436 = vunpack.c.l.b16 %v212
        %v437 = vunpack.c.h.b16 %v212
        %v438 = vunpack.c.l.b16 %v213
        %v439 = vunpack.c.l.b16 %v214
        %v440 = vunpack.c.h.b16 %v214
        %v441 = vunpack.c.l.b16 %v215
        %v442 = vunpack.c.l.b16 %v216
        %v443 = vunpack.c.h.b16 %v216
        %v444 = vunpack.c.l.b16 %v217
        %v445 = vunpack.c.l.b16 %v218
        %v446 = vunpack.c.h.b16 %v218
        %v447 = vunpack.c.l.b16 %v219
        %v448 = vunpack.c.l.b16 %v220
        %v449 = vunpack.c.h.b16 %v220
        %v450 = vunpack.c.l.b16 %v221
        %v451 = vunpack.c.l.b16 %v222
        %v452 = vunpack.c.h.b16 %v222
        %v453 = vunpack.c.l.b16 %v223
        %v454 = vunpack.c.l.b16 %v224
        %v455 = vunpack.c.h.b16 %v224
        %v456 = vunpack.c.l.b16 %v225
        %v457 = vunpack.c.l.b16 %v226
        %v458 = vunpack.c.h.b16 %v226
        %v459 = vunpack.c.l.b16 %v227
        %v460 = vunpack.c.l.b16 %v228
        %v461 = vunpack.c.h.b16 %v228
        %v462 = vunpack.c.l.b16 %v229
        %v463 = vunpack.c.l.b16 %v230
        %v464 = vunpack.c.h.b16 %v230
        %v465 = vunpack.c.l.b16 %v231
        %v466 = vunpack.c.l.b16 %v232
        %v467 = vunpack.c.h.b16 %v232
        %v468 = vunpack.c.l.b16 %v233
        %v469 = vunpack.c.l.b16 %v234
        %v470 = vunpack.c.h.b16 %v234
        %v471 = vunpack.c.l.b16 %v235
        %v472 = vunpack.c.l.b16 %v236
        %v473 = vunpack.c.h.b16 %v236
        %v474 = vunpack.c.l.b16 %v237
        %v475 = vunpack.c.l.b16 %v238
        %v476 = vunpack.c.h.b16 %v238
        %v477 = vunpack.c.l.b16 %v239
        %v478 = vunpack.c.l.b16 %v240
        %v479 = vunpack.c.h.b16 %v240
        %v480 = vunpack.c.l.b16 %v241
        %v481 = vunpack.c.l.b16 %v242
        %v482 = vunpack.c.h.b16 %v242
        %v483 = vunpack.c.l.b16 %v243
        %v484 = vunpack.c.l.b16 %v244
        %v485 = vunpack.c.h.b16 %v244
        %v486 = vunpack.c.l.b16 %v245
        %v487 = vunpack.c.l.b16 %v246
        %v488 = vunpack.c.h.b16 %v246
        %v489 = vunpack.c.l.b16 %v247
        %v490 = vunpack.c.l.b16 %v248
        %v491 = vunpack.c.h.b16 %v248
        %v492 = vunpack.c.l.b16 %v249
        %v493 = vunpack.c.l.b16 %v250
        %v494 = vunpack.c.h.b16 %v250
        %v495 = vunpack.c.l.b16 %v251
        %v496 = vunpack.c.l.b16 %v252
        %v497 = vunpack.c.h.b16 %v252
        %v498 = vunpack.c.l.b16 %v253
        %v499 = vunpack.c.l.b16 %v254
        %v500 = vunpack.c.h.b16 %v254
        %v501 = vunpack.c.l.b16 %v255
        %v502 = vunpack.c.l.b16 %v256
        %v503 = vunpack.c.h.b16 %v256
        %v504 = vunpack.c.l.b16 %v257
        %v505 = vunpack.c.l.b16 %v258
        %v506 = vunpack.c.h.b16 %v258
        %v507 = vunpack.c.l.b16 %v259
        %v508 = vpack.c.b16 %v439, %v436
        %v509 = vpack.c.b16 %v440, %v437
        %v510 = vpack.c.b16 %v441, %v438
        %v511 = vpack.c.b16 %v445, %v442
        %v512 = vpack.c.b16 %v446, %v443
        %v513 = vpack.c.b16 %v447, %v444
        %v514 = vpack.c.b16 %v451, %v448
        %v515 = vpack.c.b16 %v452, %v449
        %v516 = vpack.c.b16 %v453, %v450
        %v517 = vpack.c.b16 %v457, %v454
        %v518 = vpack.c.b16 %v458, %v455
        %v519 = vpack.c.b16 %v459, %v456
        %v520 = vpack.c.b16 %v463, %v460
        %v521 = vpack.c.b16 %v464, %v461
        %v522 = vpack.c.b16 %v465, %v462
        %v523 = vpack.c.b16 %v469, %v466
        %v524 = vpack.c.b16 %v470, %v467
        %v525 = vpack.c.b16 %v471, %v468
        %v526 = vpack.c.b16 %v475, %v472
        %v527 = vpack.c.b16 %v476, %v473
        %v528 = vpack.c.b16 %v477, %v474
        %v529 = vpack.c.b16 %v481, %v478
        %v530 = vpack.c.b16 %v482, %v479
        %v531 = vpack.c.b16 %v483, %v480
        %v532 = vpack.c.b16 %v487, %v484
        %v533 = vpack.c.b16 %v488, %v485
        %v534 = vpack.c.b16 %v489, %v486
        %v535 = vpack.c.b16 %v493, %v490
        %v536 = vpack.c.b16 %v494, %v491
        %v537 = vpack.c.b16 %v495, %v492
        %v538 = vpack.c.b16 %v499, %v496
        %v539 = vpack.c.b16 %v500, %v497
        %v540 = vpack.c.b16 %v501, %v498
        %v541 = vpack.c.b16 %v505, %v502
        %v542 = vpack.c.b16 %v506, %v503
        %v543 = vpack.c.b16 %v507, %v504
        %580 = vmatprep.subr.bf16.mxu0 %v530
        %581 = vmatpush1.bf16.xpose.msra.mxu0 %v529
        %582 = vmatprep.subr.bf16.mxu0 %v527
        %583 = vmatpush1.bf16.xpose.msra.mxu0 %v526
        %584 = vmatprep.subr.bf16.mxu0 %v524
        %585 = vmatpush1.bf16.xpose.msra.mxu0 %v523
        %586 = vmatprep.subr.bf16.mxu0 %v521
        %587 = vmatpush1.bf16.xpose.msra.mxu0 %v520
        %588 = vmatprep.subr.bf16.mxu0 %v518
        %589 = vmatpush1.bf16.xpose.msra.mxu0 %v517
        %590 = vmatprep.subr.bf16.mxu0 %v515
        %591 = vmatpush1.bf16.xpose.msra.mxu0 %v514
        %592 = vmatprep.subr.bf16.mxu0 %v512
        %593 = vmatpush1.bf16.xpose.msra.mxu0 %v511
        %594 = vmatprep.subr.bf16.mxu0 %v509
        %595 = vmatpush1.bf16.xpose.msra.mxu0 %v508
        %596 = vmatprep.subr.bf16.mxu0 0
        %597 = vmatpush2.bf16.xpose.msra.mxu0 0
        %598 = vmatprep.subr.bf16.mxu0 0
        %599 = vmatpush2.bf16.xpose.msra.mxu0 0
        %600 = vmatprep.subr.bf16.mxu0 0
        %601 = vmatpush2.bf16.xpose.msra.mxu0 0
        %602 = vmatprep.subr.bf16.mxu0 0
        %603 = vmatpush2.bf16.xpose.msra.mxu0 0
        %604 = vmatprep.subr.bf16.mxu0 %v542
        %605 = vmatpush2.bf16.xpose.msra.mxu0 %v541
        %606 = vmatprep.subr.bf16.mxu0 %v539
        %607 = vmatpush2.bf16.xpose.msra.mxu0 %v538
        %608 = vmatprep.subr.bf16.mxu0 %v536
        %609 = vmatpush2.bf16.xpose.msra.mxu0 %v535
        %610 = vmatprep.subr.bf16.mxu0 %v533
        %611 = vmatpush2.bf16.xpose.msra.mxu0 %v532
        %612 = vmatprep.mubr.bf16.mxu0 %v341
        %613 = vmatmul.mubr.bf16.gmra.mxu0 %v340
        %v614 = vpop.f32.mrf.mxu0
        %v615 = vadd.f32 0.0, %v614
        %v616 = vpop.f32.mrf.mxu0
        %v617 = vadd.f32 0.0, %v616
        %v618 = vpop.f32.mrf.mxu0
        %v619 = vadd.f32 0.0, %v618
        %v620 = vpop.f32.mrf.mxu0
        %v621 = vadd.f32 0.0, %v620
        %622 = vmatprep.mubr.bf16.mxu0 %v344
        %623 = vmatmul.mubr.bf16.gmra.mxu0 %v343
        %v624 = vpop.f32.mrf.mxu0
        %v625 = vadd.f32 0.0, %v624
        %v626 = vpop.f32.mrf.mxu0
        %v627 = vadd.f32 0.0, %v626
        %v628 = vpop.f32.mrf.mxu0
        %v629 = vadd.f32 0.0, %v628
        %v630 = vpop.f32.mrf.mxu0
        %v631 = vadd.f32 0.0, %v630
        %632 = vmatprep.mubr.bf16.mxu0 %v347
        %633 = vmatmul.mubr.bf16.gmra.mxu0 %v346
        %v634 = vpop.f32.mrf.mxu0
        %v635 = vadd.f32 0.0, %v634
        %v636 = vpop.f32.mrf.mxu0
        %v637 = vadd.f32 0.0, %v636
        %v638 = vpop.f32.mrf.mxu0
        %v639 = vadd.f32 0.0, %v638
        %v640 = vpop.f32.mrf.mxu0
        %v641 = vadd.f32 0.0, %v640
        %642 = vmatprep.mubr.bf16.mxu0 %v350
        %643 = vmatmul.mubr.bf16.gmra.mxu0 %v349
        %v644 = vpop.f32.mrf.mxu0
        %v645 = vadd.f32 0.0, %v644
        %v646 = vpop.f32.mrf.mxu0
        %v647 = vadd.f32 0.0, %v646
        %v648 = vpop.f32.mrf.mxu0
        %v649 = vadd.f32 0.0, %v648
        %v650 = vpop.f32.mrf.mxu0
        %v651 = vadd.f32 0.0, %v650
        %652 = vmatprep.mubr.bf16.mxu0 %v353
        %653 = vmatmul.mubr.bf16.gmra.mxu0 %v352
        %v654 = vpop.f32.mrf.mxu0
        %v655 = vadd.f32 0.0, %v654
        %v656 = vpop.f32.mrf.mxu0
        %v657 = vadd.f32 0.0, %v656
        %v658 = vpop.f32.mrf.mxu0
        %v659 = vadd.f32 0.0, %v658
        %v660 = vpop.f32.mrf.mxu0
        %v661 = vadd.f32 0.0, %v660
        %662 = vmatprep.mubr.bf16.mxu0 %v356
        %663 = vmatmul.mubr.bf16.gmra.mxu0 %v355
        %v664 = vpop.f32.mrf.mxu0
        %v665 = vadd.f32 0.0, %v664
        %v666 = vpop.f32.mrf.mxu0
        %v667 = vadd.f32 0.0, %v666
        %v668 = vpop.f32.mrf.mxu0
        %v669 = vadd.f32 0.0, %v668
        %v670 = vpop.f32.mrf.mxu0
        %v671 = vadd.f32 0.0, %v670
        %672 = vmatprep.mubr.bf16.mxu0 %v359
        %673 = vmatmul.mubr.bf16.gmra.mxu0 %v358
        %v674 = vpop.f32.mrf.mxu0
        %v675 = vadd.f32 0.0, %v674
        %v676 = vpop.f32.mrf.mxu0
        %v677 = vadd.f32 0.0, %v676
        %v678 = vpop.f32.mrf.mxu0
        %v679 = vadd.f32 0.0, %v678
        %v680 = vpop.f32.mrf.mxu0
        %v681 = vadd.f32 0.0, %v680
        %682 = vmatprep.mubr.bf16.mxu0 %v362
        %683 = vmatmul.mubr.bf16.gmra.mxu0 %v361
        %v684 = vpop.f32.mrf.mxu0
        %v685 = vadd.f32 0.0, %v684
        %v686 = vpop.f32.mrf.mxu0
        %v687 = vadd.f32 0.0, %v686
        %v688 = vpop.f32.mrf.mxu0
        %v689 = vadd.f32 0.0, %v688
        %v690 = vpop.f32.mrf.mxu0
        %v691 = vadd.f32 0.0, %v690
        %692 = vdwg.mxu0
        %693 = vmatprep.subr.bf16.mxu0 0
        %694 = vmatpush1.bf16.xpose.msra.mxu0 %v531
        %695 = vmatprep.subr.bf16.mxu0 0
        %696 = vmatpush1.bf16.xpose.msra.mxu0 %v528
        %697 = vmatprep.subr.bf16.mxu0 0
        %698 = vmatpush1.bf16.xpose.msra.mxu0 %v525
        %699 = vmatprep.subr.bf16.mxu0 0
        %700 = vmatpush1.bf16.xpose.msra.mxu0 %v522
        %701 = vmatprep.subr.bf16.mxu0 0
        %702 = vmatpush1.bf16.xpose.msra.mxu0 %v519
        %703 = vmatprep.subr.bf16.mxu0 0
        %704 = vmatpush1.bf16.xpose.msra.mxu0 %v516
        %705 = vmatprep.subr.bf16.mxu0 0
        %706 = vmatpush1.bf16.xpose.msra.mxu0 %v513
        %707 = vmatprep.subr.bf16.mxu0 0
        %708 = vmatpush1.bf16.xpose.msra.mxu0 %v510
        %709 = vmatprep.subr.bf16.mxu0 0
        %710 = vmatpush2.bf16.xpose.msra.mxu0 0
        %711 = vmatprep.subr.bf16.mxu0 0
        %712 = vmatpush2.bf16.xpose.msra.mxu0 0
        %713 = vmatprep.subr.bf16.mxu0 0
        %714 = vmatpush2.bf16.xpose.msra.mxu0 0
        %715 = vmatprep.subr.bf16.mxu0 0
        %716 = vmatpush2.bf16.xpose.msra.mxu0 0
        %717 = vmatprep.subr.bf16.mxu0 0
        %718 = vmatpush2.bf16.xpose.msra.mxu0 %v543
        %719 = vmatprep.subr.bf16.mxu0 0
        %720 = vmatpush2.bf16.xpose.msra.mxu0 %v540
        %721 = vmatprep.subr.bf16.mxu0 0
        %722 = vmatpush2.bf16.xpose.msra.mxu0 %v537
        %723 = vmatprep.subr.bf16.mxu0 0
        %724 = vmatpush2.bf16.xpose.msra.mxu0 %v534
        %725 = vmatprep.mubr.bf16.mxu0 0
        %726 = vmatmul.mubr.bf16.gmra.mxu0 %v342
        %v727 = vpop.f32.mrf.mxu0
        %v728 = vadd.f32 %v615, %v727
        %v729 = vpop.f32.mrf.mxu0
        %v730 = vadd.f32 %v617, %v729
        %v731 = vpop.f32.mrf.mxu0
        %v732 = vadd.f32 %v619, %v731
        %v733 = vpop.f32.mrf.mxu0
        %v734 = vadd.f32 %v621, %v733
        %735 = vmatprep.mubr.bf16.mxu0 0
        %736 = vmatmul.mubr.bf16.gmra.mxu0 %v345
        %v737 = vpop.f32.mrf.mxu0
        %v738 = vadd.f32 %v625, %v737
        %v739 = vpop.f32.mrf.mxu0
        %v740 = vadd.f32 %v627, %v739
        %v741 = vpop.f32.mrf.mxu0
        %v742 = vadd.f32 %v629, %v741
        %v743 = vpop.f32.mrf.mxu0
        %v744 = vadd.f32 %v631, %v743
        %745 = vmatprep.mubr.bf16.mxu0 0
        %746 = vmatmul.mubr.bf16.gmra.mxu0 %v348
        %v747 = vpop.f32.mrf.mxu0
        %v748 = vadd.f32 %v635, %v747
        %v749 = vpop.f32.mrf.mxu0
        %v750 = vadd.f32 %v637, %v749
        %v751 = vpop.f32.mrf.mxu0
        %v752 = vadd.f32 %v639, %v751
        %v753 = vpop.f32.mrf.mxu0
        %v754 = vadd.f32 %v641, %v753
        %755 = vmatprep.mubr.bf16.mxu0 0
        %756 = vmatmul.mubr.bf16.gmra.mxu0 %v351
        %v757 = vpop.f32.mrf.mxu0
        %v758 = vadd.f32 %v645, %v757
        %v759 = vpop.f32.mrf.mxu0
        %v760 = vadd.f32 %v647, %v759
        %v761 = vpop.f32.mrf.mxu0
        %v762 = vadd.f32 %v649, %v761
        %v763 = vpop.f32.mrf.mxu0
        %v764 = vadd.f32 %v651, %v763
        %765 = vmatprep.mubr.bf16.mxu0 0
        %766 = vmatmul.mubr.bf16.gmra.mxu0 %v354
        %v767 = vpop.f32.mrf.mxu0
        %v768 = vadd.f32 %v655, %v767
        %v769 = vpop.f32.mrf.mxu0
        %v770 = vadd.f32 %v657, %v769
        %v771 = vpop.f32.mrf.mxu0
        %v772 = vadd.f32 %v659, %v771
        %v773 = vpop.f32.mrf.mxu0
        %v774 = vadd.f32 %v661, %v773
        %775 = vmatprep.mubr.bf16.mxu0 0
        %776 = vmatmul.mubr.bf16.gmra.mxu0 %v357
        %v777 = vpop.f32.mrf.mxu0
        %v778 = vadd.f32 %v665, %v777
        %v779 = vpop.f32.mrf.mxu0
        %v780 = vadd.f32 %v667, %v779
        %v781 = vpop.f32.mrf.mxu0
        %v782 = vadd.f32 %v669, %v781
        %v783 = vpop.f32.mrf.mxu0
        %v784 = vadd.f32 %v671, %v783
        %785 = vmatprep.mubr.bf16.mxu0 0
        %786 = vmatmul.mubr.bf16.gmra.mxu0 %v360
        %v787 = vpop.f32.mrf.mxu0
        %v788 = vadd.f32 %v675, %v787
        %v789 = vpop.f32.mrf.mxu0
        %v790 = vadd.f32 %v677, %v789
        %v791 = vpop.f32.mrf.mxu0
        %v792 = vadd.f32 %v679, %v791
        %v793 = vpop.f32.mrf.mxu0
        %v794 = vadd.f32 %v681, %v793
        %795 = vmatprep.mubr.bf16.mxu0 0
        %796 = vmatmul.mubr.bf16.gmra.mxu0 %v363
        %v797 = vpop.f32.mrf.mxu0
        %v798 = vadd.f32 %v685, %v797
        %v799 = vpop.f32.mrf.mxu0
        %v800 = vadd.f32 %v687, %v799
        %v801 = vpop.f32.mrf.mxu0
        %v802 = vadd.f32 %v689, %v801
        %v803 = vpop.f32.mrf.mxu0
        %v804 = vadd.f32 %v691, %v803
        %805 = vdwg.mxu0
        %v806 = vpack.c.bf16 %v732, %v728
        %v807 = vpack.c.bf16 %v742, %v738
        %v808 = vpack.c.bf16 %v752, %v748
        %v809 = vpack.c.bf16 %v762, %v758
        %v810 = vpack.c.bf16 %v772, %v768
        %v811 = vpack.c.bf16 %v782, %v778
        %v812 = vpack.c.bf16 %v792, %v788
        %v813 = vpack.c.bf16 %v802, %v798
        %v814 = vpack.c.bf16 %v734, %v730
        %v815 = vpack.c.bf16 %v744, %v740
        %v816 = vpack.c.bf16 %v754, %v750
        %v817 = vpack.c.bf16 %v764, %v760
        %v818 = vpack.c.bf16 %v774, %v770
        %v819 = vpack.c.bf16 %v784, %v780
        %v820 = vpack.c.bf16 %v794, %v790
        %v821 = vpack.c.bf16 %v804, %v800
        %830 = vrot.lane.b32.xlu0 %v806, 64
        %v831 = vpop.permute.xlu0 %830
        %832 = vrot.lane.b32.xlu0 %v807, 64
        %v833 = vpop.permute.xlu0 %832
        %834 = vrot.lane.b32.xlu0 %v808, 64
        %v835 = vpop.permute.xlu0 %834
        %836 = vrot.lane.b32.xlu0 %v809, 64
        %v837 = vpop.permute.xlu0 %836
        %838 = vrot.lane.b32.xlu0 %v810, 64
        %v839 = vpop.permute.xlu0 %838
        %840 = vrot.lane.b32.xlu0 %v811, 64
        %v841 = vpop.permute.xlu0 %840
        %842 = vrot.lane.b32.xlu0 %v812, 64
        %v843 = vpop.permute.xlu0 %842
        %844 = vrot.lane.b32.xlu0 %v813, 64
        %v845 = vpop.permute.xlu0 %844
        %vm846 = vcmask 523264
        %v848 = vsel %vm846, %v806, 0
        %v851 = vsel %vm846, %v807, 0
        %v854 = vsel %vm846, %v808, 0
        %v857 = vsel %vm846, %v809, 0
        %v860 = vsel %vm846, %v810, 0
        %v863 = vsel %vm846, %v811, 0
        %v866 = vsel %vm846, %v812, 0
        %v869 = vsel %vm846, %v813, 0
        %v872 = vsel %vm846, %v831, 0
        %v875 = vsel %vm846, %v833, 0
        %v878 = vsel %vm846, %v835, 0
        %v881 = vsel %vm846, %v837, 0
        %v884 = vsel %vm846, %v839, 0
        %v887 = vsel %vm846, %v841, 0
        %v890 = vsel %vm846, %v843, 0
        %v893 = vsel %vm846, %v845, 0
        %895 = vmatprep.subr.bf16.mxu0 0
        %896 = vmatpush1.bf16.xpose.msra.mxu0 %v893
        %897 = vmatprep.subr.bf16.mxu0 0
        %898 = vmatpush1.bf16.xpose.msra.mxu0 %v890
        %899 = vmatprep.subr.bf16.mxu0 0
        %900 = vmatpush1.bf16.xpose.msra.mxu0 %v887
        %901 = vmatprep.subr.bf16.mxu0 0
        %902 = vmatpush1.bf16.xpose.msra.mxu0 %v884
        %903 = vmatprep.subr.bf16.mxu0 0
        %904 = vmatpush1.bf16.xpose.msra.mxu0 %v881
        %905 = vmatprep.subr.bf16.mxu0 0
        %906 = vmatpush1.bf16.xpose.msra.mxu0 %v878
        %907 = vmatprep.subr.bf16.mxu0 0
        %908 = vmatpush1.bf16.xpose.msra.mxu0 %v875
        %909 = vmatprep.subr.bf16.mxu0 0
        %910 = vmatpush1.bf16.xpose.msra.mxu0 %v872
        %911 = vmatprep.subr.bf16.mxu0 0
        %912 = vmatpush2.bf16.xpose.msra.mxu0 0
        %913 = vmatprep.subr.bf16.mxu0 0
        %914 = vmatpush2.bf16.xpose.msra.mxu0 0
        %915 = vmatprep.subr.bf16.mxu0 0
        %916 = vmatpush2.bf16.xpose.msra.mxu0 0
        %917 = vmatprep.subr.bf16.mxu0 0
        %918 = vmatpush2.bf16.xpose.msra.mxu0 0
        %919 = vmatprep.subr.bf16.mxu0 0
        %920 = vmatpush2.bf16.xpose.msra.mxu0 0
        %921 = vmatprep.subr.bf16.mxu0 0
        %922 = vmatpush2.bf16.xpose.msra.mxu0 0
        %923 = vmatprep.subr.bf16.mxu0 0
        %924 = vmatpush2.bf16.xpose.msra.mxu0 0
        %925 = vmatprep.subr.bf16.mxu0 0
        %926 = vmatpush2.bf16.xpose.msra.mxu0 0
        %927 = vmatprep.mubr.bf16.mxu0 0
        %928 = vmatmul.mubr.bf16.gmra.mxu0 %v848
        %v929 = vpop.f32.mrf.mxu0
        %v930 = vadd.f32 0.0, %v929
        %v931 = vpop.f32.mrf.mxu0
        %v932 = vpop.f32.mrf.mxu0
        %v933 = vadd.f32 0.0, %v932
        %v934 = vpop.f32.mrf.mxu0
        %935 = vmatprep.mubr.bf16.mxu0 0
        %936 = vmatmul.mubr.bf16.gmra.mxu0 %v851
        %v937 = vpop.f32.mrf.mxu0
        %v938 = vadd.f32 0.0, %v937
        %v939 = vpop.f32.mrf.mxu0
        %v940 = vpop.f32.mrf.mxu0
        %v941 = vadd.f32 0.0, %v940
        %v942 = vpop.f32.mrf.mxu0
        %943 = vmatprep.mubr.bf16.mxu0 0
        %944 = vmatmul.mubr.bf16.gmra.mxu0 %v854
        %v945 = vpop.f32.mrf.mxu0
        %v946 = vadd.f32 0.0, %v945
        %v947 = vpop.f32.mrf.mxu0
        %v948 = vpop.f32.mrf.mxu0
        %v949 = vadd.f32 0.0, %v948
        %v950 = vpop.f32.mrf.mxu0
        %951 = vmatprep.mubr.bf16.mxu0 0
        %952 = vmatmul.mubr.bf16.gmra.mxu0 %v857
        %v953 = vpop.f32.mrf.mxu0
        %v954 = vadd.f32 0.0, %v953
        %v955 = vpop.f32.mrf.mxu0
        %v956 = vpop.f32.mrf.mxu0
        %v957 = vadd.f32 0.0, %v956
        %v958 = vpop.f32.mrf.mxu0
        %959 = vmatprep.mubr.bf16.mxu0 0
        %960 = vmatmul.mubr.bf16.gmra.mxu0 %v860
        %v961 = vpop.f32.mrf.mxu0
        %v962 = vadd.f32 0.0, %v961
        %v963 = vpop.f32.mrf.mxu0
        %v964 = vpop.f32.mrf.mxu0
        %v965 = vadd.f32 0.0, %v964
        %v966 = vpop.f32.mrf.mxu0
        %967 = vmatprep.mubr.bf16.mxu0 0
        %968 = vmatmul.mubr.bf16.gmra.mxu0 %v863
        %v969 = vpop.f32.mrf.mxu0
        %v970 = vadd.f32 0.0, %v969
        %v971 = vpop.f32.mrf.mxu0
        %v972 = vpop.f32.mrf.mxu0
        %v973 = vadd.f32 0.0, %v972
        %v974 = vpop.f32.mrf.mxu0
        %975 = vmatprep.mubr.bf16.mxu0 0
        %976 = vmatmul.mubr.bf16.gmra.mxu0 %v866
        %v977 = vpop.f32.mrf.mxu0
        %v978 = vadd.f32 0.0, %v977
        %v979 = vpop.f32.mrf.mxu0
        %v980 = vpop.f32.mrf.mxu0
        %v981 = vadd.f32 0.0, %v980
        %v982 = vpop.f32.mrf.mxu0
        %983 = vmatprep.mubr.bf16.mxu0 0
        %984 = vmatmul.mubr.bf16.gmra.mxu0 %v869
        %v985 = vpop.f32.mrf.mxu0
        %v986 = vadd.f32 0.0, %v985
        %v987 = vpop.f32.mrf.mxu0
        %v988 = vpop.f32.mrf.mxu0
        %v989 = vadd.f32 0.0, %v988
        %v990 = vpop.f32.mrf.mxu0
        %991 = vdwg.mxu0
        %v992 = vlaneseq
        %v993 = vshrl.u32 %v992, 7
        %v994 = vadd.s32 %v993, 8
        %v995 = vadd.s32 %v993, 16
        %v996 = vadd.s32 %v993, 24
        %v997 = vadd.s32 %v993, 32
        %v998 = vadd.s32 %v993, 40
        %v999 = vadd.s32 %v993, 48
        %v1000 = vadd.s32 %v993, 56
        %v1001 = vadd.s32 %v993, 64
        %v1002 = vadd.s32 %v993, 72
        %v1003 = vadd.s32 %v993, 80
        %v1004 = vadd.s32 %v993, 88
        %v1005 = vadd.s32 %v993, 96
        %v1006 = vadd.s32 %v993, 104
        %v1007 = vadd.s32 %v993, 112
        %v1008 = vadd.s32 %v993, 120
        %v1009 = vlaneseq
        %v1010 = vand.u32 %v1009, 127
        %vm1011 = vcmp.le.s32.totalorder %v1010, %v993
        %vm1012 = vcmp.le.s32.totalorder %v1010, %v994
        %vm1013 = vcmp.le.s32.totalorder %v1010, %v995
        %vm1014 = vcmp.le.s32.totalorder %v1010, %v996
        %vm1015 = vcmp.le.s32.totalorder %v1010, %v997
        %vm1016 = vcmp.le.s32.totalorder %v1010, %v998
        %vm1017 = vcmp.le.s32.totalorder %v1010, %v999
        %vm1018 = vcmp.le.s32.totalorder %v1010, %v1000
        %vm1019 = vcmp.le.s32.totalorder %v1010, %v1001
        %vm1020 = vcmp.le.s32.totalorder %v1010, %v1002
        %vm1021 = vcmp.le.s32.totalorder %v1010, %v1003
        %vm1022 = vcmp.le.s32.totalorder %v1010, %v1004
        %vm1023 = vcmp.le.s32.totalorder %v1010, %v1005
        %vm1024 = vcmp.le.s32.totalorder %v1010, %v1006
        %vm1025 = vcmp.le.s32.totalorder %v1010, %v1007
        %vm1026 = vcmp.le.s32.totalorder %v1010, %v1008
        %v1027 = vsel %vm1011, %v930, -inf
        %v1028 = vsel %vm1012, %v933, -inf
        %v1029 = vsel %vm1013, %v938, -inf
        %v1030 = vsel %vm1014, %v941, -inf
        %v1031 = vsel %vm1015, %v946, -inf
        %v1032 = vsel %vm1016, %v949, -inf
        %v1033 = vsel %vm1017, %v954, -inf
        %v1034 = vsel %vm1018, %v957, -inf
        %v1035 = vsel %vm1019, %v962, -inf
        %v1036 = vsel %vm1020, %v965, -inf
        %v1037 = vsel %vm1021, %v970, -inf
        %v1038 = vsel %vm1022, %v973, -inf
        %v1039 = vsel %vm1023, %v978, -inf
        %v1040 = vsel %vm1024, %v981, -inf
        %v1041 = vsel %vm1025, %v986, -inf
        %v1042 = vsel %vm1026, %v989, -inf
        %1043 = vmax.xlane.f32.xlu0 %v1027
        %v1044 = vpop.xlane.xlu0 %1043
        %1045 = vmax.xlane.f32.xlu0 %v1028
        %v1046 = vpop.xlane.xlu0 %1045
        %1047 = vmax.xlane.f32.xlu0 %v1029
        %v1048 = vpop.xlane.xlu0 %1047
        %1049 = vmax.xlane.f32.xlu0 %v1030
        %v1050 = vpop.xlane.xlu0 %1049
        %1051 = vmax.xlane.f32.xlu0 %v1031
        %v1052 = vpop.xlane.xlu0 %1051
        %1053 = vmax.xlane.f32.xlu0 %v1032
        %v1054 = vpop.xlane.xlu0 %1053
        %1055 = vmax.xlane.f32.xlu0 %v1033
        %v1056 = vpop.xlane.xlu0 %1055
        %1057 = vmax.xlane.f32.xlu0 %v1034
        %v1058 = vpop.xlane.xlu0 %1057
        %1059 = vmax.xlane.f32.xlu0 %v1035
        %v1060 = vpop.xlane.xlu0 %1059
        %1061 = vmax.xlane.f32.xlu0 %v1036
        %v1062 = vpop.xlane.xlu0 %1061
        %1063 = vmax.xlane.f32.xlu0 %v1037
        %v1064 = vpop.xlane.xlu0 %1063
        %1065 = vmax.xlane.f32.xlu0 %v1038
        %v1066 = vpop.xlane.xlu0 %1065
        %1067 = vmax.xlane.f32.xlu0 %v1039
        %v1068 = vpop.xlane.xlu0 %1067
        %1069 = vmax.xlane.f32.xlu0 %v1040
        %v1070 = vpop.xlane.xlu0 %1069
        %1071 = vmax.xlane.f32.xlu0 %v1041
        %v1072 = vpop.xlane.xlu0 %1071
        %1073 = vmax.xlane.f32.xlu0 %v1042
        %v1074 = vpop.xlane.xlu0 %1073
        %v1075 = vsub.f32 %v1027, %v1044
        %v1076 = vsub.f32 %v1028, %v1046
        %v1077 = vsub.f32 %v1029, %v1048
        %v1078 = vsub.f32 %v1030, %v1050
        %v1079 = vsub.f32 %v1031, %v1052
        %v1080 = vsub.f32 %v1032, %v1054
        %v1081 = vsub.f32 %v1033, %v1056
        %v1082 = vsub.f32 %v1034, %v1058
        %v1083 = vsub.f32 %v1035, %v1060
        %v1084 = vsub.f32 %v1036, %v1062
        %v1085 = vsub.f32 %v1037, %v1064
        %v1086 = vsub.f32 %v1038, %v1066
        %v1087 = vsub.f32 %v1039, %v1068
        %v1088 = vsub.f32 %v1040, %v1070
        %v1089 = vsub.f32 %v1041, %v1072
        %v1090 = vsub.f32 %v1042, %v1074
        %v1091 = vmul.f32 %v1075, 1.442695
        %v1092 = vpow.pop %v1091
        %v1093 = vmul.f32 %v1076, 1.442695
        %v1094 = vpow.pop %v1093
        %v1095 = vmul.f32 %v1077, 1.442695
        %v1096 = vpow.pop %v1095
        %v1097 = vmul.f32 %v1078, 1.442695
        %v1098 = vpow.pop %v1097
        %v1099 = vmul.f32 %v1079, 1.442695
        %v1100 = vpow.pop %v1099
        %v1101 = vmul.f32 %v1080, 1.442695
        %v1102 = vpow.pop %v1101
        %v1103 = vmul.f32 %v1081, 1.442695
        %v1104 = vpow.pop %v1103
        %v1105 = vmul.f32 %v1082, 1.442695
        %v1106 = vpow.pop %v1105
        %v1107 = vmul.f32 %v1083, 1.442695
        %v1108 = vpow.pop %v1107
        %v1109 = vmul.f32 %v1084, 1.442695
        %v1110 = vpow.pop %v1109
        %v1111 = vmul.f32 %v1085, 1.442695
        %v1112 = vpow.pop %v1111
        %v1113 = vmul.f32 %v1086, 1.442695
        %v1114 = vpow.pop %v1113
        %v1115 = vmul.f32 %v1087, 1.442695
        %v1116 = vpow.pop %v1115
        %v1117 = vmul.f32 %v1088, 1.442695
        %v1118 = vpow.pop %v1117
        %v1119 = vmul.f32 %v1089, 1.442695
        %v1120 = vpow.pop %v1119
        %v1121 = vmul.f32 %v1090, 1.442695
        %v1122 = vpow.pop %v1121
        %1123 = vadd.xlane.f32.xlu0 %v1092
        %v1124 = vpop.xlane.xlu0 %1123
        %1125 = vadd.xlane.f32.xlu0 %v1094
        %v1126 = vpop.xlane.xlu0 %1125
        %1127 = vadd.xlane.f32.xlu0 %v1096
        %v1128 = vpop.xlane.xlu0 %1127
        %1129 = vadd.xlane.f32.xlu0 %v1098
        %v1130 = vpop.xlane.xlu0 %1129
        %1131 = vadd.xlane.f32.xlu0 %v1100
        %v1132 = vpop.xlane.xlu0 %1131
        %1133 = vadd.xlane.f32.xlu0 %v1102
        %v1134 = vpop.xlane.xlu0 %1133
        %1135 = vadd.xlane.f32.xlu0 %v1104
        %v1136 = vpop.xlane.xlu0 %1135
        %1137 = vadd.xlane.f32.xlu0 %v1106
        %v1138 = vpop.xlane.xlu0 %1137
        %1139 = vadd.xlane.f32.xlu0 %v1108
        %v1140 = vpop.xlane.xlu0 %1139
        %1141 = vadd.xlane.f32.xlu0 %v1110
        %v1142 = vpop.xlane.xlu0 %1141
        %1143 = vadd.xlane.f32.xlu0 %v1112
        %v1144 = vpop.xlane.xlu0 %1143
        %1145 = vadd.xlane.f32.xlu0 %v1114
        %v1146 = vpop.xlane.xlu0 %1145
        %1147 = vadd.xlane.f32.xlu0 %v1116
        %v1148 = vpop.xlane.xlu0 %1147
        %1149 = vadd.xlane.f32.xlu0 %v1118
        %v1150 = vpop.xlane.xlu0 %1149
        %1151 = vadd.xlane.f32.xlu0 %v1120
        %v1152 = vpop.xlane.xlu0 %1151
        %1153 = vadd.xlane.f32.xlu0 %v1122
        %v1154 = vpop.xlane.xlu0 %1153
        %v1155 = vrcp.pop %v1124
        %v1156 = vrcp.pop %v1126
        %v1157 = vrcp.pop %v1128
        %v1158 = vrcp.pop %v1130
        %v1159 = vrcp.pop %v1132
        %v1160 = vrcp.pop %v1134
        %v1161 = vrcp.pop %v1136
        %v1162 = vrcp.pop %v1138
        %v1163 = vrcp.pop %v1140
        %v1164 = vrcp.pop %v1142
        %v1165 = vrcp.pop %v1144
        %v1166 = vrcp.pop %v1146
        %v1167 = vrcp.pop %v1148
        %v1168 = vrcp.pop %v1150
        %v1169 = vrcp.pop %v1152
        %v1170 = vrcp.pop %v1154
        %v1171 = vmul.f32 %v1092, %v1155
        %v1172 = vmul.f32 %v1094, %v1156
        %v1173 = vmul.f32 %v1096, %v1157
        %v1174 = vmul.f32 %v1098, %v1158
        %v1175 = vmul.f32 %v1100, %v1159
        %v1176 = vmul.f32 %v1102, %v1160
        %v1177 = vmul.f32 %v1104, %v1161
        %v1178 = vmul.f32 %v1106, %v1162
        %v1179 = vmul.f32 %v1108, %v1163
        %v1180 = vmul.f32 %v1110, %v1164
        %v1181 = vmul.f32 %v1112, %v1165
        %v1182 = vmul.f32 %v1114, %v1166
        %v1183 = vmul.f32 %v1116, %v1167
        %v1184 = vmul.f32 %v1118, %v1168
        %v1185 = vmul.f32 %v1120, %v1169
        %v1186 = vmul.f32 %v1122, %v1170
        %v1187 = vpack.c.bf16 %v1172, %v1171
        %v1188 = vpack.c.bf16 %v1174, %v1173
        %v1189 = vpack.c.bf16 %v1176, %v1175
        %v1190 = vpack.c.bf16 %v1178, %v1177
        %v1191 = vpack.c.bf16 %v1180, %v1179
        %v1192 = vpack.c.bf16 %v1182, %v1181
        %v1193 = vpack.c.bf16 %v1184, %v1183
        %v1194 = vpack.c.bf16 %v1186, %v1185
        %1195 = vmatprep.subr.bf16.mxu0 0
        %1196 = vmatpush1.bf16.msra.mxu0 %v821
        %1197 = vmatprep.subr.bf16.mxu0 0
        %1198 = vmatpush1.bf16.msra.mxu0 %v820
        %1199 = vmatprep.subr.bf16.mxu0 0
        %1200 = vmatpush1.bf16.msra.mxu0 %v819
        %1201 = vmatprep.subr.bf16.mxu0 0
        %1202 = vmatpush1.bf16.msra.mxu0 %v818
        %1203 = vmatprep.subr.bf16.mxu0 0
        %1204 = vmatpush1.bf16.msra.mxu0 %v817
        %1205 = vmatprep.subr.bf16.mxu0 0
        %1206 = vmatpush1.bf16.msra.mxu0 %v816
        %1207 = vmatprep.subr.bf16.mxu0 0
        %1208 = vmatpush1.bf16.msra.mxu0 %v815
        %1209 = vmatprep.subr.bf16.mxu0 0
        %1210 = vmatpush1.bf16.msra.mxu0 %v814
        %1211 = vmatprep.subr.bf16.mxu0 0
        %1212 = vmatpush2.bf16.msra.mxu0 0
        %1213 = vmatprep.subr.bf16.mxu0 0
        %1214 = vmatpush2.bf16.msra.mxu0 0
        %1215 = vmatprep.subr.bf16.mxu0 0
        %1216 = vmatpush2.bf16.msra.mxu0 0
        %1217 = vmatprep.subr.bf16.mxu0 0
        %1218 = vmatpush2.bf16.msra.mxu0 0
        %1219 = vmatprep.subr.bf16.mxu0 0
        %1220 = vmatpush2.bf16.msra.mxu0 0
        %1221 = vmatprep.subr.bf16.mxu0 0
        %1222 = vmatpush2.bf16.msra.mxu0 0
        %1223 = vmatprep.subr.bf16.mxu0 0
        %1224 = vmatpush2.bf16.msra.mxu0 0
        %1225 = vmatprep.subr.bf16.mxu0 0
        %1226 = vmatpush2.bf16.msra.mxu0 0
        %1227 = vmatprep.mubr.bf16.mxu0 0
        %1228 = vmatmul.mubr.bf16.gmra.mxu0 %v1187
        %v1229 = vpop.f32.mrf.mxu0
        %v1230 = vadd.f32 0.0, %v1229
        %v1231 = vpop.f32.mrf.mxu0
        %v1232 = vpop.f32.mrf.mxu0
        %v1233 = vadd.f32 0.0, %v1232
        %v1234 = vpop.f32.mrf.mxu0
        %1235 = vmatprep.mubr.bf16.mxu0 0
        %1236 = vmatmul.mubr.bf16.gmra.mxu0 %v1188
        %v1237 = vpop.f32.mrf.mxu0
        %v1238 = vadd.f32 0.0, %v1237
        %v1239 = vpop.f32.mrf.mxu0
        %v1240 = vpop.f32.mrf.mxu0
        %v1241 = vadd.f32 0.0, %v1240
        %v1242 = vpop.f32.mrf.mxu0
        %1243 = vmatprep.mubr.bf16.mxu0 0
        %1244 = vmatmul.mubr.bf16.gmra.mxu0 %v1189
        %v1245 = vpop.f32.mrf.mxu0
        %v1246 = vadd.f32 0.0, %v1245
        %v1247 = vpop.f32.mrf.mxu0
        %v1248 = vpop.f32.mrf.mxu0
        %v1249 = vadd.f32 0.0, %v1248
        %v1250 = vpop.f32.mrf.mxu0
        %1251 = vmatprep.mubr.bf16.mxu0 0
        %1252 = vmatmul.mubr.bf16.gmra.mxu0 %v1190
        %v1253 = vpop.f32.mrf.mxu0
        %v1254 = vadd.f32 0.0, %v1253
        %v1255 = vpop.f32.mrf.mxu0
        %v1256 = vpop.f32.mrf.mxu0
        %v1257 = vadd.f32 0.0, %v1256
        %v1258 = vpop.f32.mrf.mxu0
        %1259 = vmatprep.mubr.bf16.mxu0 0
        %1260 = vmatmul.mubr.bf16.gmra.mxu0 %v1191
        %v1261 = vpop.f32.mrf.mxu0
        %v1262 = vadd.f32 0.0, %v1261
        %v1263 = vpop.f32.mrf.mxu0
        %v1264 = vpop.f32.mrf.mxu0
        %v1265 = vadd.f32 0.0, %v1264
        %v1266 = vpop.f32.mrf.mxu0
        %1267 = vmatprep.mubr.bf16.mxu0 0
        %1268 = vmatmul.mubr.bf16.gmra.mxu0 %v1192
        %v1269 = vpop.f32.mrf.mxu0
        %v1270 = vadd.f32 0.0, %v1269
        %v1271 = vpop.f32.mrf.mxu0
        %v1272 = vpop.f32.mrf.mxu0
        %v1273 = vadd.f32 0.0, %v1272
        %v1274 = vpop.f32.mrf.mxu0
        %1275 = vmatprep.mubr.bf16.mxu0 0
        %1276 = vmatmul.mubr.bf16.gmra.mxu0 %v1193
        %v1277 = vpop.f32.mrf.mxu0
        %v1278 = vadd.f32 0.0, %v1277
        %v1279 = vpop.f32.mrf.mxu0
        %v1280 = vpop.f32.mrf.mxu0
        %v1281 = vadd.f32 0.0, %v1280
        %v1282 = vpop.f32.mrf.mxu0
        %1283 = vmatprep.mubr.bf16.mxu0 0
        %1284 = vmatmul.mubr.bf16.gmra.mxu0 %v1194
        %v1285 = vpop.f32.mrf.mxu0
        %v1286 = vadd.f32 0.0, %v1285
        %v1287 = vpop.f32.mrf.mxu0
        %v1288 = vpop.f32.mrf.mxu0
        %v1289 = vadd.f32 0.0, %v1288
        %v1290 = vpop.f32.mrf.mxu0
        %1291 = vdwg.mxu0
        %1292 = vst.msk [vmem:[%s178] sm:$0xff] %vm846, %v1230
        %1293 = vst.msk [vmem:[%s178 + $0x8] sm:$0xff] %vm846, %v1233
        %1294 = vst.msk [vmem:[%s178 + $0x10] sm:$0xff] %vm846, %v1238
        %1295 = vst.msk [vmem:[%s178 + $0x18] sm:$0xff] %vm846, %v1241
        %1296 = vst.msk [vmem:[%s178 + $0x20] sm:$0xff] %vm846, %v1246
        %1297 = vst.msk [vmem:[%s178 + $0x28] sm:$0xff] %vm846, %v1249
        %1298 = vst.msk [vmem:[%s178 + $0x30] sm:$0xff] %vm846, %v1254
        %1299 = vst.msk [vmem:[%s178 + $0x38] sm:$0xff] %vm846, %v1257
        %1300 = vst.msk [vmem:[%s178 + $0x40] sm:$0xff] %vm846, %v1262
        %1301 = vst.msk [vmem:[%s178 + $0x48] sm:$0xff] %vm846, %v1265
        %1302 = vst.msk [vmem:[%s178 + $0x50] sm:$0xff] %vm846, %v1270
        %1303 = vst.msk [vmem:[%s178 + $0x58] sm:$0xff] %vm846, %v1273
        %1304 = vst.msk [vmem:[%s178 + $0x60] sm:$0xff] %vm846, %v1278
        %1305 = vst.msk [vmem:[%s178 + $0x68] sm:$0xff] %vm846, %v1281
        %1306 = vst.msk [vmem:[%s178 + $0x70] sm:$0xff] %vm846, %v1286
        %1307 = vst.msk [vmem:[%s178 + $0x78] sm:$0xff] %vm846, %v1289
        %p1308 = scmp.lt.s32.totalorder %s17, 1
        %s1309 = scalar_select %p1308, %s17, 1
        %s1310 = smul.addr %s1309, 16
        %s1311 = smul.addr %s1310, 8
        %s1312 = scalar_lea.vmem %s2, %s1311
        // Predicated region
        $region37: #{tpu_custom_call.1} parent=27 // pred_check
          %p1313 = pneg %p82
        $region38: #{tpu_custom_call.1} parent=27 // pred_check_branch
          %1315 = sbr.rel (%p1313) target = $region40
        $region39: #{tpu_custom_call.1} parent=27 // pred_region
          _
        $region40: #{tpu_custom_call.1} parent=27 // pred_fallthru
          _
      $region28: #{tpu_custom_call.1} parent=5 // pred_fallthru
        _
      %p1316 = scmp.le.s32.totalorder 2, %s12
      // Predicated region
      $region41: #{tpu_custom_call.1} parent=5 // pred_check
        %p1317 = pneg %p1316
      $region42: #{tpu_custom_call.1} parent=5 // pred_check_branch
        %1319 = sbr.rel (%p1317) target = $region44
      $region43: #{tpu_custom_call.1} parent=5 // pred_region
        %s1320 = ssub.s32 %s12, 2
        // Predicated region
        $region45: #{tpu_custom_call.1} parent=43 // pred_check
          %p1321 = pneg %p88
        $region46: #{tpu_custom_call.1} parent=43 // pred_check_branch
          %1323 = sbr.rel (%p1321) target = $region48
        $region47: #{tpu_custom_call.1} parent=43 // pred_region
          %p1324 = scmp.lt.s32.totalorder %s18, 1
          %s1325 = scalar_select %p1324, %s18, 1
          %s1326 = smul.addr %s1325, 16
          %s1327 = smul.addr %s1326, 8
          %s1328 = scalar_lea.vmem %s2, %s1327
        $region48: #{tpu_custom_call.1} parent=43 // pred_fallthru
          _
      $region44: #{tpu_custom_call.1} parent=5 // pred_fallthru
        _
    $region6: #{tpu_custom_call.1} parent=1 // loop_footer
      %s16 = sadd.s32 1, %s12
    $region7: #{tpu_custom_call.1} parent=1 // loop_footer_branch
      %11 = sbr.rel target = $region3
    $region8: #{tpu_custom_call.1} parent=1 // loop_exit
      _
    %1329 = vsyncpa [#allocation3], 1
    %s1330 = scalar_lea.sflag [#allocation3], 1
    %1331 = vsyncpa %s1330, 1
    %1332 = vsyncpa [#allocation5], 1

</llo_original>
